<compile_context>
chip_gen: v6e
topology: v6e:2x2x1
jax: 0.10.0
libtpu: 0.0.40
codegen_flags: <defaults>
</compile_context>

<pallas_src>
import jax
import jax.numpy as jnp
from jax.experimental import pallas as pl
from jax.experimental.pallas import tpu as pltpu


def _round_up(v, m):
    return ((v + m - 1) // m) * m


def tdgammon_forward(x, w1, b1, w2, b2, *, block_batch=2048,
                     matmul_dtype=jnp.bfloat16, act_dtype=None, x_buffers=2):
    """Fused TD-Gammon forward: sigmoid(sigmoid(x @ W1 + b1) @ W2 + b2).

    x : (B, In) float32 board features
    w1: (In, H);  b1: (H,) or (1, H)
    w2: (H, O);   b2: (O,), (1, O) or (1, 1)
    returns (B, O) float32
    """
    B, In = x.shape
    H = w1.shape[1]
    O = w2.shape[1]
    if act_dtype is None:
        act_dtype = matmul_dtype

    H_P = _round_up(H, 128)                 # 32 -> 128 (lane tile)
    O_P = _round_up(O, 8)                   # 1  -> 8   (sublane tile of out slab)

    # Adaptive batch tile: multiple of 256, never (much) larger than needed,
    # and small enough to keep >= 2 grid steps when B allows (v7x megacore).
    half = _round_up(pl.cdiv(B, 2), 256)
    TB = max(256, min((int(block_batch) // 256) * 256, half))
    grid_n = pl.cdiv(B, TB)                 # final block may be partial (OK)
    B_pad = grid_n * TB

    def pad2(a, shape, dtype):
        # Pads are zero-initialized and must stay exactly zero: zero-padded W2
        # rows neutralize the 0.5 activations on padded hidden lanes.
        z = jnp.zeros(shape, dtype)
        return z.at[: a.shape[0], : a.shape[1]].set(a.astype(dtype))

    w1_p = pad2(w1, (In, H_P), matmul_dtype)                     # pad H only
    b1_p = pad2(jnp.reshape(b1, (1, -1)), (1, H_P), jnp.float32)
    w2_p = pad2(jnp.reshape(w2, (H, O)).T, (O_P, H_P), jnp.float32)
    b2_p = pad2(jnp.reshape(b2, (-1, 1)), (O_P, 1), jnp.float32)

    def kernel(x_ref, w1_ref, b1_ref, w2_ref, b2_ref, out_ref):
        # Layer 1: (TB, In) @ (In, H_P) on the MXU, f32 accumulation.
        xb = x_ref[...].astype(matmul_dtype)                     # VPU cast
        z1 = jnp.dot(xb, w1_ref[...], preferred_element_type=jnp.float32)
        zh = z1 + b1_ref[...]                                    # (TB, H_P) f32
        # sigmoid(z) = 0.5*tanh(0.5*z) + 0.5 : one EUP push per element.
        # tanh in act_dtype (bf16 on the default path: 2x EUP rate on v6e/v7x).
        th = jnp.tanh((zh * 0.5).astype(act_dtype))
        h = th.astype(jnp.float32) * 0.5 + 0.5                   # (TB, H_P) f32

        # Layer 2: (O_P, H_P) x (TB, H_P)^T -> (O_P, TB): batch on the LANE
        # axis of the result -> lane-dense, unmasked stores.
        z2 = jax.lax.dot_general(
            w2_ref[...], h,
            dimension_numbers=(((1,), (1,)), ((), ())),
            preferred_element_type=jnp.float32)                  # (O_P, TB)
        zo = z2 + b2_ref[...]                                    # b2: (O_P, 1)
        out_ref[...] = jnp.tanh(zo * 0.5) * 0.5 + 0.5

    # x streams (boundary-clamped final block); weights stay VMEM-resident
    # across grid steps (constant index_maps).
    if int(x_buffers) != 2:
        x_spec = pl.BlockSpec((TB, In), lambda i: (i, 0),
                              pipeline_mode=pl.Buffered(int(x_buffers)))
    else:
        x_spec = pl.BlockSpec((TB, In), lambda i: (i, 0))

    cost = pl.CostEstimate(
        flops=2 * B_pad * (In * H_P + H_P * O_P),
        transcendentals=B_pad * (H_P + O_P),
        bytes_accessed=(x.size * x.dtype.itemsize
                        + w1_p.size * w1_p.dtype.itemsize
                        + (b1_p.size + w2_p.size + b2_p.size) * 4
                        + O_P * B_pad * 4),
    )

    out = pl.pallas_call(
        kernel,
        out_shape=jax.ShapeDtypeStruct((O_P, B_pad), jnp.float32),
        grid=(grid_n,),
        in_specs=[
            x_spec,                                           # x tile (streamed)
            pl.BlockSpec((In, H_P), lambda i: (0, 0)),        # W1 (resident)
            pl.BlockSpec((1, H_P), lambda i: (0, 0)),         # b1 (resident)
            pl.BlockSpec((O_P, H_P), lambda i: (0, 0)),       # W2^T (resident)
            pl.BlockSpec((O_P, 1), lambda i: (0, 0)),         # b2 (resident)
        ],
        out_specs=pl.BlockSpec((O_P, TB), lambda i: (0, i)),  # lane-dense slab
        compiler_params=pltpu.CompilerParams(
            dimension_semantics=("parallel",)),
        cost_estimate=cost,
    )(x, w1_p, b1_p, w2_p, b2_p)

    # Row o of `out` holds output unit o for all (padded) boards on lanes.
    return out[:O, :B].T


def reference_forward(x, w1, b1, w2, b2):
    h = jax.nn.sigmoid(x @ w1 + b1)
    return jax.nn.sigmoid(h @ w2 + b2)


if __name__ == "__main__":
    # Shapes implied by TDGammon(hidden_units=32, game_type='long'):
    #   input_units=196, output_units=1.  Batch=1000 exercises the adaptive
    #   tile (TB=512, 2 grid steps) and a partial boundary block.
    batch = 1000
    input_units = 196
    hidden_units = 32
    output_units = 1

    key = jax.random.PRNGKey(0)
    kx, kw1, kb1, kw2, kb2 = jax.random.split(key, 5)

    x = jax.random.uniform(kx, (batch, input_units), jnp.float32)  # features in [0, 1]
    s1 = 1.0 / jnp.sqrt(input_units)
    s2 = 1.0 / jnp.sqrt(hidden_units)
    w1 = jax.random.uniform(kw1, (input_units, hidden_units), jnp.float32, -s1, s1)
    b1 = jax.random.uniform(kb1, (1, hidden_units), jnp.float32, -s1, s1)
    w2 = jax.random.uniform(kw2, (hidden_units, output_units), jnp.float32, -s2, s2)
    b2 = jax.random.uniform(kb2, (1, output_units), jnp.float32, -s2, s2)

    ref = reference_forward(x, w1, b1, w2, b2)

    # Default path: bf16 layer-1 matmul + bf16 hidden tanh, f32 accumulation.
    out = jax.block_until_ready(tdgammon_forward(x, w1, b1, w2, b2))
    assert out.shape == (batch, output_units)
    assert jnp.allclose(out, ref, atol=5e-3, rtol=5e-3), \
        float(jnp.max(jnp.abs(out - ref)))

    # Full-f32 path at the original tiny batch (B=2) -- tight numerical check.
    out2 = jax.block_until_ready(
        tdgammon_forward(x[:2], w1, b1, w2, b2, matmul_dtype=jnp.float32))
    assert out2.shape == (2, output_units)
    assert jnp.allclose(out2, ref[:2], atol=1e-4, rtol=1e-4), (out2, ref[:2])

    # TODO(synk): BaseModel.update_weights (TD(lambda) eligibility-trace update),
    # train_agent, checkpoint/load are host-side training logic, not part of the
    # forward pass, and are not implemented as kernels here.
    print("KERNEL_OK")
</pallas_src>

<mosaic_0001>
module attributes {stable_mosaic.version = 11 : i64} {
  func.func @kernel(%arg0: i32, %arg1: memref<512x196xf32, #tpu.memory_space<vmem>>, %arg2: memref<196x128xbf16, #tpu.memory_space<vmem>>, %arg3: memref<1x128xf32, #tpu.memory_space<vmem>>, %arg4: memref<8x128xf32, #tpu.memory_space<vmem>>, %arg5: memref<8x1xf32, #tpu.memory_space<vmem>>, %arg6: memref<8x512xf32, #tpu.memory_space<vmem>>) attributes {dimension_semantics = [#tpu.dimension_semantics<parallel>], iteration_bounds = array<i64: 2>, scalar_prefetch = 0 : i64, scratch_operands = 0 : i64, tpu.core_type = #tpu.core_type<tc>, window_params = [{transform_indices = @transform_0, window_bounds = array<i64: 512, 196>}, {pipeline_mode = #tpu.pipeline_mode<synchronous>, transform_indices = @transform_1, window_bounds = array<i64: 196, 128>}, {pipeline_mode = #tpu.pipeline_mode<synchronous>, transform_indices = @transform_2, window_bounds = array<i64: 1, 128>}, {pipeline_mode = #tpu.pipeline_mode<synchronous>, transform_indices = @transform_3, window_bounds = array<i64: 8, 128>}, {pipeline_mode = #tpu.pipeline_mode<synchronous>, transform_indices = @transform_4, window_bounds = array<i64: 8, 1>}, {transform_indices = @transform_5, window_bounds = array<i64: 8, 512>}]} {
    %c0 = arith.constant 0 : index
    %c0_0 = arith.constant 0 : index
    %0 = vector.load %arg1[%c0, %c0_0] : memref<512x196xf32, #tpu.memory_space<vmem>>, vector<512x196xf32>
    %1 = arith.truncf %0 : vector<512x196xf32> to vector<512x196xbf16>
    %c0_1 = arith.constant 0 : index
    %c0_2 = arith.constant 0 : index
    %2 = vector.load %arg2[%c0_1, %c0_2] : memref<196x128xbf16, #tpu.memory_space<vmem>>, vector<196x128xbf16>
    %cst = arith.constant dense<0.000000e+00> : vector<512x128xf32>
    %3 = tpu.matmul %1, %2, %cst {dimension_numbers = #tpu.dot_dimension_numbers<[1], [0], [0], [1], [0, 0, 1, 1], [], []>} : vector<512x196xbf16>, vector<196x128xbf16>, vector<512x128xf32> -> vector<512x128xf32>
    %c0_3 = arith.constant 0 : index
    %c0_4 = arith.constant 0 : index
    %4 = vector.load %arg3[%c0_3, %c0_4] : memref<1x128xf32, #tpu.memory_space<vmem>>, vector<1x128xf32>
    %5 = vector.broadcast %4 : vector<1x128xf32> to vector<512x128xf32>
    %6 = arith.addf %3, %5 : vector<512x128xf32>
    %cst_5 = arith.constant 5.000000e-01 : f32
    %7 = vector.broadcast %cst_5 : f32 to vector<512x128xf32>
    %8 = arith.mulf %6, %7 : vector<512x128xf32>
    %9 = arith.truncf %8 : vector<512x128xf32> to vector<512x128xbf16>
    %10 = math.tanh %9 : vector<512x128xbf16>
    %11 = arith.extf %10 : vector<512x128xbf16> to vector<512x128xf32>
    %cst_6 = arith.constant 5.000000e-01 : f32
    %12 = vector.broadcast %cst_6 : f32 to vector<512x128xf32>
    %13 = arith.mulf %11, %12 : vector<512x128xf32>
    %cst_7 = arith.constant 5.000000e-01 : f32
    %14 = vector.broadcast %cst_7 : f32 to vector<512x128xf32>
    %15 = arith.addf %13, %14 : vector<512x128xf32>
    %c0_8 = arith.constant 0 : index
    %c0_9 = arith.constant 0 : index
    %16 = vector.load %arg4[%c0_8, %c0_9] : memref<8x128xf32, #tpu.memory_space<vmem>>, vector<8x128xf32>
    %cst_10 = arith.constant dense<0.000000e+00> : vector<8x512xf32>
    %17 = tpu.matmul %16, %15, %cst_10 {dimension_numbers = #tpu.dot_dimension_numbers<[1], [1], [0], [0], [0, 0, 1, 0], [], []>} : vector<8x128xf32>, vector<512x128xf32>, vector<8x512xf32> -> vector<8x512xf32>
    %c0_11 = arith.constant 0 : index
    %c0_12 = arith.constant 0 : index
    %18 = vector.load %arg5[%c0_11, %c0_12] : memref<8x1xf32, #tpu.memory_space<vmem>>, vector<8x1xf32>
    %19 = vector.broadcast %18 : vector<8x1xf32> to vector<8x512xf32>
    %20 = arith.addf %17, %19 : vector<8x512xf32>
    %cst_13 = arith.constant 5.000000e-01 : f32
    %21 = vector.broadcast %cst_13 : f32 to vector<8x512xf32>
    %22 = arith.mulf %20, %21 : vector<8x512xf32>
    %23 = math.tanh %22 : vector<8x512xf32>
    %cst_14 = arith.constant 5.000000e-01 : f32
    %24 = vector.broadcast %cst_14 : f32 to vector<8x512xf32>
    %25 = arith.mulf %23, %24 : vector<8x512xf32>
    %cst_15 = arith.constant 5.000000e-01 : f32
    %26 = vector.broadcast %cst_15 : f32 to vector<8x512xf32>
    %27 = arith.addf %25, %26 : vector<8x512xf32>
    %c0_16 = arith.constant 0 : index
    %c0_17 = arith.constant 0 : index
    %28 = vector.load %arg6[%c0_16, %c0_17] : memref<8x512xf32, #tpu.memory_space<vmem>>, vector<8x512xf32>
    tpu.vector_store %arg6[%c0_16, %c0_17], %27 {strides = array<i32>} : memref<8x512xf32, #tpu.memory_space<vmem>>, vector<8x512xf32>,
    return
  }
  func.func @transform_0(%arg0: i32) -> (i32, i32) {
    %c0_i32 = arith.constant 0 : i32
    %c0_i32_0 = arith.constant 0 : i32
    return %arg0, %c0_i32 : i32, i32
  }
  func.func @transform_1(%arg0: i32) -> (i32, i32) {
    %c0_i32 = arith.constant 0 : i32
    %c0_i32_0 = arith.constant 0 : i32
    %c0_i32_1 = arith.constant 0 : i32
    return %c0_i32, %c0_i32_0 : i32, i32
  }
  func.func @transform_2(%arg0: i32) -> (i32, i32) {
    %c0_i32 = arith.constant 0 : i32
    %c0_i32_0 = arith.constant 0 : i32
    %c0_i32_1 = arith.constant 0 : i32
    return %c0_i32, %c0_i32_0 : i32, i32
  }
  func.func @transform_3(%arg0: i32) -> (i32, i32) {
    %c0_i32 = arith.constant 0 : i32
    %c0_i32_0 = arith.constant 0 : i32
    %c0_i32_1 = arith.constant 0 : i32
    return %c0_i32, %c0_i32_0 : i32, i32
  }
  func.func @transform_4(%arg0: i32) -> (i32, i32) {
    %c0_i32 = arith.constant 0 : i32
    %c0_i32_0 = arith.constant 0 : i32
    %c0_i32_1 = arith.constant 0 : i32
    return %c0_i32, %c0_i32_0 : i32, i32
  }
  func.func @transform_5(%arg0: i32) -> (i32, i32) {
    %c0_i32 = arith.constant 0 : i32
    %c0_i32_0 = arith.constant 0 : i32
    return %c0_i32, %arg0 : i32, i32
  }
}

</mosaic_0001>

<llo_original>
// kernel: tpu_custom_call.1
$region0: #{tpu_custom_call.1}
  #allocation0 [shape = 'u32[]', space=smem, size = 0x4, offset = 0x4, fixed_abs, tag = 'smem constant byte address 0x4 - core index']
  #allocation1 [shape = 'u32[144,128]{1,0:T(1,128)}', space=vmem, size = 0x12000, scoped, tag = 'internal scratch']
  %s0 = inlined_call_operand.vmem [shape: f32[1000,196], index: 0, kind: input, shape index: {}]
  %s1 = inlined_call_operand.vmem [shape: bf16[196,128], index: 1, kind: input, shape index: {}]
  %s2 = inlined_call_operand.vmem [shape: f32[1,128], index: 2, kind: input, shape index: {}]
  %s3 = inlined_call_operand.vmem [shape: f32[8,128], index: 3, kind: input, shape index: {}]
  %s4 = inlined_call_operand.vmem [shape: f32[8,1], index: 4, kind: input, shape index: {}]
  %s5 = inlined_call_operand.hbm [shape: f32[8,1024], index: 5, kind: output, shape index: {}]
  %s6 = sld [smem:[#allocation0]]
  $region53: #{tpu_custom_call.1} parent=0
    _
  %s8 = ssub.s32 1, %s6
  %s9 = scalar_select 0, %s8, %s6
  $region1: #{tpu_custom_call.1} parent=0
    #allocation2 [shape = 'u8[32768]{0}', space=vmem, size = 0x8000, scoped, tag = 'output window, operand 0']
    #allocation3 [shape = 's32[2]{0}', space=sflag, size = 0x8, scoped, tag = 'scoped memory for tpu_custom_call.1']
    %10 = vsyncpa [#allocation3], 0
    %s11 = scalar_lea.sflag [#allocation3], 1
    %12 = vsyncpa %s11, 0
    loop: start=0, step=1, limit=4
    $region2: #{tpu_custom_call.1} parent=1 // loop_pre_header
      _
    $region3: #{tpu_custom_call.1} parent=1 // loop_header
      %s14 = sphi 0, %s18
      %p15 = scmp.ge.s32.totalorder %s14, 4
      %s24 = sphi 0, %s26
      %s27 = sphi 0, %s24
      %s28 = sphi 0, %s27
      %s44 = sphi 0, %s28
      %s48 = sphi 0, %s48
      %s50 = sphi 0, %s48
      %s51 = sphi 0, %s50
      %s65 = sphi 0, %s51
      %s69 = sphi 0, %s69
      %s71 = sphi 0, %s69
      %s72 = sphi 0, %s71
      %s86 = sphi 0, %s72
      %s90 = sphi 0, %s90
      %s92 = sphi 0, %s90
      %s93 = sphi 0, %s92
      %s107 = sphi 0, %s93
      %s111 = sphi 0, %s111
      %s113 = sphi 0, %s111
      %s114 = sphi 0, %s113
      %s128 = sphi 0, %s114
      %s134 = sphi 0, %s136
      %s137 = sphi 0, %s134
      %s138 = sphi 0, %s137
      %s154 = sphi 0, %s138
    $region4: #{tpu_custom_call.1} parent=1 // loop_header_branch
      %17 = sbr.rel (%p15) target = $region8
    $region5: #{tpu_custom_call.1} parent=1 // loop_body
      %s19 = ssub.s32 %s14, 1
      %s20 = ssub.s32 %s14, 2
      %s21 = sadd.s32 %s14, 1
      %s22 = ssub.s32 %s14, %s21
      %p23 = scmp.eq.s32.totalorder %s22, 0
      %s25 = sadd.s32 %s24, 1
      %s26 = scalar_select %p23, %s24, %s25
      %p29 = pneg %p23
      %p30 = scmp.eq.s32.totalorder %s14, 1
      %p31 = por %p29, %p30
      %p32 = scmp.ne.s32.totalorder %s24, %s27
      %p33 = scmp.eq.s32.totalorder %s14, 0
      %p34 = por %p32, %p33
      %p35 = scmp.ne.s32.totalorder %s24, %s27
      %p36 = scmp.eq.s32.totalorder %s19, 1
      %p37 = por %p35, %p36
      %p38 = scmp.ne.s32.totalorder %s27, %s28
      %p39 = scmp.eq.s32.totalorder %s19, 0
      %p40 = por %p38, %p39
      %p41 = scmp.ne.s32.totalorder %s27, %s28
      %p42 = scmp.eq.s32.totalorder %s20, 1
      %p43 = por %p41, %p42
      %p45 = scmp.ne.s32.totalorder %s28, %s44
      %p46 = scmp.eq.s32.totalorder %s20, 0
      %p47 = por %p45, %p46
      %s49 = sadd.s32 %s48, 1
      %p52 = scmp.eq.s32.totalorder %s14, 1
      %p53 = scmp.ne.s32.totalorder %s48, %s50
      %p54 = scmp.eq.s32.totalorder %s14, 0
      %p55 = por %p53, %p54
      %p56 = scmp.ne.s32.totalorder %s48, %s50
      %p57 = scmp.eq.s32.totalorder %s19, 1
      %p58 = por %p56, %p57
      %p59 = scmp.ne.s32.totalorder %s50, %s51
      %p60 = scmp.eq.s32.totalorder %s19, 0
      %p61 = por %p59, %p60
      %p62 = scmp.ne.s32.totalorder %s50, %s51
      %p63 = scmp.eq.s32.totalorder %s20, 1
      %p64 = por %p62, %p63
      %p66 = scmp.ne.s32.totalorder %s51, %s65
      %p67 = scmp.eq.s32.totalorder %s20, 0
      %p68 = por %p66, %p67
      %s70 = sadd.s32 %s69, 1
      %p73 = scmp.eq.s32.totalorder %s14, 1
      %p74 = scmp.ne.s32.totalorder %s69, %s71
      %p75 = scmp.eq.s32.totalorder %s14, 0
      %p76 = por %p74, %p75
      %p77 = scmp.ne.s32.totalorder %s69, %s71
      %p78 = scmp.eq.s32.totalorder %s19, 1
      %p79 = por %p77, %p78
      %p80 = scmp.ne.s32.totalorder %s71, %s72
      %p81 = scmp.eq.s32.totalorder %s19, 0
      %p82 = por %p80, %p81
      %p83 = scmp.ne.s32.totalorder %s71, %s72
      %p84 = scmp.eq.s32.totalorder %s20, 1
      %p85 = por %p83, %p84
      %p87 = scmp.ne.s32.totalorder %s72, %s86
      %p88 = scmp.eq.s32.totalorder %s20, 0
      %p89 = por %p87, %p88
      %s91 = sadd.s32 %s90, 1
      %p94 = scmp.eq.s32.totalorder %s14, 1
      %p95 = scmp.ne.s32.totalorder %s90, %s92
      %p96 = scmp.eq.s32.totalorder %s14, 0
      %p97 = por %p95, %p96
      %p98 = scmp.ne.s32.totalorder %s90, %s92
      %p99 = scmp.eq.s32.totalorder %s19, 1
      %p100 = por %p98, %p99
      %p101 = scmp.ne.s32.totalorder %s92, %s93
      %p102 = scmp.eq.s32.totalorder %s19, 0
      %p103 = por %p101, %p102
      %p104 = scmp.ne.s32.totalorder %s92, %s93
      %p105 = scmp.eq.s32.totalorder %s20, 1
      %p106 = por %p104, %p105
      %p108 = scmp.ne.s32.totalorder %s93, %s107
      %p109 = scmp.eq.s32.totalorder %s20, 0
      %p110 = por %p108, %p109
      %s112 = sadd.s32 %s111, 1
      %p115 = scmp.eq.s32.totalorder %s14, 1
      %p116 = scmp.ne.s32.totalorder %s111, %s113
      %p117 = scmp.eq.s32.totalorder %s14, 0
      %p118 = por %p116, %p117
      %p119 = scmp.ne.s32.totalorder %s111, %s113
      %p120 = scmp.eq.s32.totalorder %s19, 1
      %p121 = por %p119, %p120
      %p122 = scmp.ne.s32.totalorder %s113, %s114
      %p123 = scmp.eq.s32.totalorder %s19, 0
      %p124 = por %p122, %p123
      %p125 = scmp.ne.s32.totalorder %s113, %s114
      %p126 = scmp.eq.s32.totalorder %s20, 1
      %p127 = por %p125, %p126
      %p129 = scmp.ne.s32.totalorder %s114, %s128
      %p130 = scmp.eq.s32.totalorder %s20, 0
      %p131 = por %p129, %p130
      %s132 = ssub.s32 %s14, %s21
      %p133 = scmp.eq.s32.totalorder %s132, 0
      %s135 = sadd.s32 %s134, 1
      %s136 = scalar_select %p133, %s134, %s135
      %p139 = pneg %p133
      %p140 = scmp.eq.s32.totalorder %s14, 1
      %p141 = por %p139, %p140
      %p142 = scmp.ne.s32.totalorder %s134, %s137
      %p143 = scmp.eq.s32.totalorder %s14, 0
      %p144 = por %p142, %p143
      %p145 = scmp.ne.s32.totalorder %s134, %s137
      %p146 = scmp.eq.s32.totalorder %s19, 1
      %p147 = por %p145, %p146
      %p148 = scmp.ne.s32.totalorder %s137, %s138
      %p149 = scmp.eq.s32.totalorder %s19, 0
      %p150 = por %p148, %p149
      %p151 = scmp.ne.s32.totalorder %s137, %s138
      %p152 = scmp.eq.s32.totalorder %s20, 1
      %p153 = por %p151, %p152
      %p155 = scmp.ne.s32.totalorder %s138, %s154
      %p156 = scmp.eq.s32.totalorder %s20, 0
      %p157 = por %p155, %p156
      %p158 = scmp.le.s32.totalorder 1, %s14
      %p159 = scmp.lt.s32.totalorder %s14, 3
      %p160 = pnand %p158, %p159
      %p161 = pneg %p160
      // Predicated region
      $region9: #{tpu_custom_call.1} parent=5 // pred_check
        _
      $region10: #{tpu_custom_call.1} parent=5 // pred_check_branch
        %163 = sbr.rel (%p160) target = $region12
      $region11: #{tpu_custom_call.1} parent=5 // pred_region
        %s164 = ssub.s32 %s14, 1
        // Predicated region
        $region13: #{tpu_custom_call.1} parent=11 // pred_check
          %p165 = pneg %p61
        $region14: #{tpu_custom_call.1} parent=11 // pred_check_branch
          %167 = sbr.rel (%p165) target = $region16
        $region15: #{tpu_custom_call.1} parent=11 // pred_region
          _
        $region16: #{tpu_custom_call.1} parent=11 // pred_fallthru
          _
        // Predicated region
        $region17: #{tpu_custom_call.1} parent=11 // pred_check
          %p168 = pneg %p82
        $region18: #{tpu_custom_call.1} parent=11 // pred_check_branch
          %170 = sbr.rel (%p168) target = $region20
        $region19: #{tpu_custom_call.1} parent=11 // pred_region
          _
        $region20: #{tpu_custom_call.1} parent=11 // pred_fallthru
          _
        // Predicated region
        $region21: #{tpu_custom_call.1} parent=11 // pred_check
          %p171 = pneg %p103
        $region22: #{tpu_custom_call.1} parent=11 // pred_check_branch
          %173 = sbr.rel (%p171) target = $region24
        $region23: #{tpu_custom_call.1} parent=11 // pred_region
          _
        $region24: #{tpu_custom_call.1} parent=11 // pred_fallthru
          _
        // Predicated region
        $region25: #{tpu_custom_call.1} parent=11 // pred_check
          %p174 = pneg %p124
        $region26: #{tpu_custom_call.1} parent=11 // pred_check_branch
          %176 = sbr.rel (%p174) target = $region28
        $region27: #{tpu_custom_call.1} parent=11 // pred_region
          _
        $region28: #{tpu_custom_call.1} parent=11 // pred_fallthru
          _
      $region12: #{tpu_custom_call.1} parent=5 // pred_fallthru
        _
      %p177 = scmp.lt.s32.totalorder %s14, 2
      // Predicated region
      $region29: #{tpu_custom_call.1} parent=5 // pred_check
        %p178 = pneg %p177
      $region30: #{tpu_custom_call.1} parent=5 // pred_check_branch
        %180 = sbr.rel (%p178) target = $region32
      $region31: #{tpu_custom_call.1} parent=5 // pred_region
        // Predicated region
        $region33: #{tpu_custom_call.1} parent=31 // pred_check
          %p181 = pneg %p34
        $region34: #{tpu_custom_call.1} parent=31 // pred_check_branch
          %183 = sbr.rel (%p181) target = $region36
        $region35: #{tpu_custom_call.1} parent=31 // pred_region
          %s184 = smul.u32 64, %s14
          %s185 = ssub.s32 125, %s184
          %p186 = scmp.lt.s32.totalorder %s185, 64
          %s187 = scalar_select %p186, %s185, 64
          %s188 = smul.u32 128, %s187
          %s189 = smul.u32 %s188, 2
          %p190 = scmp.lt.s32.totalorder %s184, 124
          %s191 = scalar_select %p190, %s184, 124
          %s192 = smul.addr %s191, 2
          %s193 = smul.addr %s192, 8
          %s194 = scalar_lea.vmem %s0, %s193
          %s195 = smul.u32 64, %s14
          %s196 = ssub.s32 125, %s195
          %p197 = scmp.lt.s32.totalorder %s196, 64
          %s198 = scalar_select %p197, %s196, 64
          %s199 = smul.u32 128, %s198
          %s200 = smul.u32 %s199, 2
        $region36: #{tpu_custom_call.1} parent=31 // pred_fallthru
          _
      $region32: #{tpu_custom_call.1} parent=5 // pred_fallthru
        _
      %p201 = scmp.le.s32.totalorder 1, %s14
      %p202 = scmp.lt.s32.totalorder %s14, 3
      %p203 = pnand %p201, %p202
      %p204 = pneg %p203
      // Predicated region
      $region37: #{tpu_custom_call.1} parent=5 // pred_check
        _
      $region38: #{tpu_custom_call.1} parent=5 // pred_check_branch
        %206 = sbr.rel (%p203) target = $region40
      $region39: #{tpu_custom_call.1} parent=5 // pred_region
        %s207 = ssub.s32 %s14, 1
        %s208 = smul.u32 64, %s19
        %s209 = ssub.s32 125, %s208
        %p210 = scmp.lt.s32.totalorder %s209, 64
        %s211 = scalar_select %p210, %s209, 64
        %s212 = smul.u32 128, %s211
        %s213 = smul.u32 %s212, 2
        %p214 = scmp.lt.s32.totalorder %s208, 124
        %s215 = scalar_select %p214, %s208, 124
        %s216 = smul.addr %s215, 2
        %s217 = smul.addr %s216, 8
        %s218 = scalar_lea.vmem %s0, %s217
        %p219 = pneg %p40
        %p220 = pneg %p37
        %p221 = pneg %p61
        %p222 = pneg %p58
        %p223 = pneg %p82
        %p224 = pneg %p79
        %p225 = pneg %p103
        %p226 = pneg %p100
        %p227 = pneg %p124
        %p228 = pneg %p121
        %p229 = pneg %p150
        %p230 = pneg %p147
        %s231 = sand.u32 %s137, 1
        %s232 = scalar_lea.sflag [#allocation3], %s231
        %s233 = sand.u32 %s137, 1
        %s234 = smul.addr %s233, 32
        %s235 = scalar_lea.vmem [#allocation2], %s234
        %s236 = smul.u32 64, %s19
        %s237 = ssub.s32 125, %s236
        %p238 = scmp.lt.s32.totalorder %s237, 64
        %s239 = scalar_select %p238, %s237, 64
        %s240 = smul.u32 128, %s239
        %s241 = smul.u32 %s240, 2
        %p242 = scmp.lt.s32.totalorder %s236, 124
        %s243 = scalar_select %p242, %s236, 124
        %s244 = smul.addr %s243, 2
        %s245 = smul.addr %s244, 8
        %s246 = scalar_lea.vmem %s0, %s245
        %s247 = smul.u32 64, %s19
        %s248 = ssub.s32 125, %s247
        %p249 = scmp.lt.s32.totalorder %s248, 64
        %s250 = scalar_select %p249, %s248, 64
        %s251 = smul.u32 128, %s250
        %s252 = smul.u32 %s251, 2
        %s253 = smul.u32 4, %s19
        %v255 = vld [vmem:[%s246] sm:$0xff]
        %v256 = vld [vmem:[%s246 + $0x8] sm:$0xff]
        %v257 = vld [vmem:[%s246 + $0x10] sm:$0xff]
        %v258 = vld [vmem:[%s246 + $0x18] sm:$0xff]
        %v259 = vld [vmem:[%s246 + $0x20] sm:$0xff]
        %v260 = vld [vmem:[%s246 + $0x28] sm:$0xff]
        %v261 = vld [vmem:[%s246 + $0x30] sm:$0xff]
        %v262 = vld [vmem:[%s246 + $0x38] sm:$0xff]
        %v263 = vld [vmem:[%s246 + $0x40] sm:$0xff]
        %v264 = vld [vmem:[%s246 + $0x48] sm:$0xff]
        %v265 = vld [vmem:[%s246 + $0x50] sm:$0xff]
        %v266 = vld [vmem:[%s246 + $0x58] sm:$0xff]
        %v267 = vld [vmem:[%s246 + $0x60] sm:$0xff]
        %v268 = vld [vmem:[%s246 + $0x68] sm:$0xff]
        %v269 = vld [vmem:[%s246 + $0x70] sm:$0xff]
        %v270 = vld [vmem:[%s246 + $0x78] sm:$0xff]
        %v271 = vld [vmem:[%s246 + $0x80] sm:$0xff]
        %v272 = vld [vmem:[%s246 + $0x88] sm:$0xff]
        %v273 = vld [vmem:[%s246 + $0x90] sm:$0xff]
        %v274 = vld [vmem:[%s246 + $0x98] sm:$0xff]
        %v275 = vld [vmem:[%s246 + $0xa0] sm:$0xff]
        %v276 = vld [vmem:[%s246 + $0xa8] sm:$0xff]
        %v277 = vld [vmem:[%s246 + $0xb0] sm:$0xff]
        %v278 = vld [vmem:[%s246 + $0xb8] sm:$0xff]
        %v279 = vld [vmem:[%s246 + $0xc0] sm:$0xff]
        %v280 = vld [vmem:[%s246 + $0xc8] sm:$0xff]
        %v281 = vld [vmem:[%s246 + $0xd0] sm:$0xff]
        %v282 = vld [vmem:[%s246 + $0xd8] sm:$0xff]
        %v283 = vld [vmem:[%s246 + $0xe0] sm:$0xff]
        %v284 = vld [vmem:[%s246 + $0xe8] sm:$0xff]
        %v285 = vld [vmem:[%s246 + $0xf0] sm:$0xff]
        %v286 = vld [vmem:[%s246 + $0xf8] sm:$0xff]
        %v287 = vld [vmem:[%s246 + $0x100] sm:$0xff]
        %v288 = vld [vmem:[%s246 + $0x108] sm:$0xff]
        %v289 = vld [vmem:[%s246 + $0x110] sm:$0xff]
        %v290 = vld [vmem:[%s246 + $0x118] sm:$0xff]
        %v291 = vld [vmem:[%s246 + $0x120] sm:$0xff]
        %v292 = vld [vmem:[%s246 + $0x128] sm:$0xff]
        %v293 = vld [vmem:[%s246 + $0x130] sm:$0xff]
        %v294 = vld [vmem:[%s246 + $0x138] sm:$0xff]
        %v295 = vld [vmem:[%s246 + $0x140] sm:$0xff]
        %v296 = vld [vmem:[%s246 + $0x148] sm:$0xff]
        %v297 = vld [vmem:[%s246 + $0x150] sm:$0xff]
        %v298 = vld [vmem:[%s246 + $0x158] sm:$0xff]
        %v299 = vld [vmem:[%s246 + $0x160] sm:$0xff]
        %v300 = vld [vmem:[%s246 + $0x168] sm:$0xff]
        %v301 = vld [vmem:[%s246 + $0x170] sm:$0xff]
        %v302 = vld [vmem:[%s246 + $0x178] sm:$0xff]
        %v303 = vld [vmem:[%s246 + $0x180] sm:$0xff]
        %v304 = vld [vmem:[%s246 + $0x188] sm:$0xff]
        %v305 = vld [vmem:[%s246 + $0x190] sm:$0xff]
        %v306 = vld [vmem:[%s246 + $0x198] sm:$0xff]
        %v307 = vld [vmem:[%s246 + $0x1a0] sm:$0xff]
        %v308 = vld [vmem:[%s246 + $0x1a8] sm:$0xff]
        %v309 = vld [vmem:[%s246 + $0x1b0] sm:$0xff]
        %v310 = vld [vmem:[%s246 + $0x1b8] sm:$0xff]
        %v311 = vld [vmem:[%s246 + $0x1c0] sm:$0xff]
        %v312 = vld [vmem:[%s246 + $0x1c8] sm:$0xff]
        %v313 = vld [vmem:[%s246 + $0x1d0] sm:$0xff]
        %v314 = vld [vmem:[%s246 + $0x1d8] sm:$0xff]
        %v315 = vld [vmem:[%s246 + $0x1e0] sm:$0xff]
        %v316 = vld [vmem:[%s246 + $0x1e8] sm:$0xff]
        %v317 = vld [vmem:[%s246 + $0x1f0] sm:$0xff]
        %v318 = vld [vmem:[%s246 + $0x1f8] sm:$0xff]
        %v319 = vld [vmem:[%s246 + $0x200] sm:$0xff]
        %v320 = vld [vmem:[%s246 + $0x208] sm:$0xff]
        %v321 = vld [vmem:[%s246 + $0x210] sm:$0xff]
        %v322 = vld [vmem:[%s246 + $0x218] sm:$0xff]
        %v323 = vld [vmem:[%s246 + $0x220] sm:$0xff]
        %v324 = vld [vmem:[%s246 + $0x228] sm:$0xff]
        %v325 = vld [vmem:[%s246 + $0x230] sm:$0xff]
        %v326 = vld [vmem:[%s246 + $0x238] sm:$0xff]
        %v327 = vld [vmem:[%s246 + $0x240] sm:$0xff]
        %v328 = vld [vmem:[%s246 + $0x248] sm:$0xff]
        %v329 = vld [vmem:[%s246 + $0x250] sm:$0xff]
        %v330 = vld [vmem:[%s246 + $0x258] sm:$0xff]
        %v331 = vld [vmem:[%s246 + $0x260] sm:$0xff]
        %v332 = vld [vmem:[%s246 + $0x268] sm:$0xff]
        %v333 = vld [vmem:[%s246 + $0x270] sm:$0xff]
        %v334 = vld [vmem:[%s246 + $0x278] sm:$0xff]
        %v335 = vld [vmem:[%s246 + $0x280] sm:$0xff]
        %v336 = vld [vmem:[%s246 + $0x288] sm:$0xff]
        %v337 = vld [vmem:[%s246 + $0x290] sm:$0xff]
        %v338 = vld [vmem:[%s246 + $0x298] sm:$0xff]
        %v339 = vld [vmem:[%s246 + $0x2a0] sm:$0xff]
        %v340 = vld [vmem:[%s246 + $0x2a8] sm:$0xff]
        %v341 = vld [vmem:[%s246 + $0x2b0] sm:$0xff]
        %v342 = vld [vmem:[%s246 + $0x2b8] sm:$0xff]
        %v343 = vld [vmem:[%s246 + $0x2c0] sm:$0xff]
        %v344 = vld [vmem:[%s246 + $0x2c8] sm:$0xff]
        %v345 = vld [vmem:[%s246 + $0x2d0] sm:$0xff]
        %v346 = vld [vmem:[%s246 + $0x2d8] sm:$0xff]
        %v347 = vld [vmem:[%s246 + $0x2e0] sm:$0xff]
        %v348 = vld [vmem:[%s246 + $0x2e8] sm:$0xff]
        %v349 = vld [vmem:[%s246 + $0x2f0] sm:$0xff]
        %v350 = vld [vmem:[%s246 + $0x2f8] sm:$0xff]
        %v351 = vld [vmem:[%s246 + $0x300] sm:$0xff]
        %v352 = vld [vmem:[%s246 + $0x308] sm:$0xff]
        %v353 = vld [vmem:[%s246 + $0x310] sm:$0xff]
        %v354 = vld [vmem:[%s246 + $0x318] sm:$0xff]
        %v355 = vld [vmem:[%s246 + $0x320] sm:$0xff]
        %v356 = vld [vmem:[%s246 + $0x328] sm:$0xff]
        %v357 = vld [vmem:[%s246 + $0x330] sm:$0xff]
        %v358 = vld [vmem:[%s246 + $0x338] sm:$0xff]
        %v359 = vld [vmem:[%s246 + $0x340] sm:$0xff]
        %v360 = vld [vmem:[%s246 + $0x348] sm:$0xff]
        %v361 = vld [vmem:[%s246 + $0x350] sm:$0xff]
        %v362 = vld [vmem:[%s246 + $0x358] sm:$0xff]
        %v363 = vld [vmem:[%s246 + $0x360] sm:$0xff]
        %v364 = vld [vmem:[%s246 + $0x368] sm:$0xff]
        %v365 = vld [vmem:[%s246 + $0x370] sm:$0xff]
        %v366 = vld [vmem:[%s246 + $0x378] sm:$0xff]
        %v367 = vld [vmem:[%s246 + $0x380] sm:$0xff]
        %v368 = vld [vmem:[%s246 + $0x388] sm:$0xff]
        %v369 = vld [vmem:[%s246 + $0x390] sm:$0xff]
        %v370 = vld [vmem:[%s246 + $0x398] sm:$0xff]
        %v371 = vld [vmem:[%s246 + $0x3a0] sm:$0xff]
        %v372 = vld [vmem:[%s246 + $0x3a8] sm:$0xff]
        %v373 = vld [vmem:[%s246 + $0x3b0] sm:$0xff]
        %v374 = vld [vmem:[%s246 + $0x3b8] sm:$0xff]
        %v375 = vld [vmem:[%s246 + $0x3c0] sm:$0xff]
        %v376 = vld [vmem:[%s246 + $0x3c8] sm:$0xff]
        %v377 = vld [vmem:[%s246 + $0x3d0] sm:$0xff]
        %v378 = vld [vmem:[%s246 + $0x3d8] sm:$0xff]
        %v379 = vld [vmem:[%s246 + $0x3e0] sm:$0xff]
        %v380 = vld [vmem:[%s246 + $0x3e8] sm:$0xff]
        %v381 = vld [vmem:[%s246 + $0x3f0] sm:$0xff]
        %v382 = vld [vmem:[%s246 + $0x3f8] sm:$0xff]
        %v383 = vpack.c.bf16 %v257, %v255
        %v384 = vpack.c.bf16 %v258, %v256
        %v385 = vpack.c.bf16 %v261, %v259
        %v386 = vpack.c.bf16 %v262, %v260
        %v387 = vpack.c.bf16 %v265, %v263
        %v388 = vpack.c.bf16 %v266, %v264
        %v389 = vpack.c.bf16 %v269, %v267
        %v390 = vpack.c.bf16 %v270, %v268
        %v391 = vpack.c.bf16 %v273, %v271
        %v392 = vpack.c.bf16 %v274, %v272
        %v393 = vpack.c.bf16 %v277, %v275
        %v394 = vpack.c.bf16 %v278, %v276
        %v395 = vpack.c.bf16 %v281, %v279
        %v396 = vpack.c.bf16 %v282, %v280
        %v397 = vpack.c.bf16 %v285, %v283
        %v398 = vpack.c.bf16 %v286, %v284
        %v399 = vpack.c.bf16 %v289, %v287
        %v400 = vpack.c.bf16 %v290, %v288
        %v401 = vpack.c.bf16 %v293, %v291
        %v402 = vpack.c.bf16 %v294, %v292
        %v403 = vpack.c.bf16 %v297, %v295
        %v404 = vpack.c.bf16 %v298, %v296
        %v405 = vpack.c.bf16 %v301, %v299
        %v406 = vpack.c.bf16 %v302, %v300
        %v407 = vpack.c.bf16 %v305, %v303
        %v408 = vpack.c.bf16 %v306, %v304
        %v409 = vpack.c.bf16 %v309, %v307
        %v410 = vpack.c.bf16 %v310, %v308
        %v411 = vpack.c.bf16 %v313, %v311
        %v412 = vpack.c.bf16 %v314, %v312
        %v413 = vpack.c.bf16 %v317, %v315
        %v414 = vpack.c.bf16 %v318, %v316
        %v415 = vpack.c.bf16 %v321, %v319
        %v416 = vpack.c.bf16 %v322, %v320
        %v417 = vpack.c.bf16 %v325, %v323
        %v418 = vpack.c.bf16 %v326, %v324
        %v419 = vpack.c.bf16 %v329, %v327
        %v420 = vpack.c.bf16 %v330, %v328
        %v421 = vpack.c.bf16 %v333, %v331
        %v422 = vpack.c.bf16 %v334, %v332
        %v423 = vpack.c.bf16 %v337, %v335
        %v424 = vpack.c.bf16 %v338, %v336
        %v425 = vpack.c.bf16 %v341, %v339
        %v426 = vpack.c.bf16 %v342, %v340
        %v427 = vpack.c.bf16 %v345, %v343
        %v428 = vpack.c.bf16 %v346, %v344
        %v429 = vpack.c.bf16 %v349, %v347
        %v430 = vpack.c.bf16 %v350, %v348
        %v431 = vpack.c.bf16 %v353, %v351
        %v432 = vpack.c.bf16 %v354, %v352
        %v433 = vpack.c.bf16 %v357, %v355
        %v434 = vpack.c.bf16 %v358, %v356
        %v435 = vpack.c.bf16 %v361, %v359
        %v436 = vpack.c.bf16 %v362, %v360
        %v437 = vpack.c.bf16 %v365, %v363
        %v438 = vpack.c.bf16 %v366, %v364
        %v439 = vpack.c.bf16 %v369, %v367
        %v440 = vpack.c.bf16 %v370, %v368
        %v441 = vpack.c.bf16 %v373, %v371
        %v442 = vpack.c.bf16 %v374, %v372
        %v443 = vpack.c.bf16 %v377, %v375
        %v444 = vpack.c.bf16 %v378, %v376
        %v445 = vpack.c.bf16 %v381, %v379
        %v446 = vpack.c.bf16 %v382, %v380
        %v447 = vld [vmem:[%s1] sm:$0xf]
        %v448 = vld [vmem:[%s1 + $0x4] sm:$0xf]
        %v449 = vld [vmem:[%s1 + $0x8] sm:$0xf]
        %v450 = vld [vmem:[%s1 + $0xc] sm:$0xf]
        %v451 = vld [vmem:[%s1 + $0x10] sm:$0xf]
        %v452 = vld [vmem:[%s1 + $0x14] sm:$0xf]
        %v453 = vld [vmem:[%s1 + $0x18] sm:$0xf]
        %v454 = vld [vmem:[%s1 + $0x1c] sm:$0xf]
        %v455 = vld [vmem:[%s1 + $0x20] sm:$0xf]
        %v456 = vld [vmem:[%s1 + $0x24] sm:$0xf]
        %v457 = vld [vmem:[%s1 + $0x28] sm:$0xf]
        %v458 = vld [vmem:[%s1 + $0x2c] sm:$0xf]
        %v459 = vld [vmem:[%s1 + $0x30] sm:$0xf]
        %v460 = vld [vmem:[%s1 + $0x34] sm:$0xf]
        %v461 = vld [vmem:[%s1 + $0x38] sm:$0xf]
        %v462 = vld [vmem:[%s1 + $0x3c] sm:$0xf]
        %v463 = vld [vmem:[%s1 + $0x40] sm:$0xf]
        %v464 = vld [vmem:[%s1 + $0x44] sm:$0xf]
        %v465 = vld [vmem:[%s1 + $0x48] sm:$0xf]
        %v466 = vld [vmem:[%s1 + $0x4c] sm:$0xf]
        %v467 = vld [vmem:[%s1 + $0x50] sm:$0xf]
        %v468 = vld [vmem:[%s1 + $0x54] sm:$0xf]
        %v469 = vld [vmem:[%s1 + $0x58] sm:$0xf]
        %v470 = vld [vmem:[%s1 + $0x5c] sm:$0xf]
        %v471 = vld [vmem:[%s1 + $0x60] sm:$0x3]
        %v472 = vld [vmem:[%s2] sm:$0x1]
        %v474 = vlaneseq
        %v475 = vshrl.u32 %v474, 7
        %v476 = vsub.s32 0, %v475
        %v477 = vrot.slane %v472, %v476
        %v504 = vunpack.c.l.b16 %v447
        %v505 = vunpack.c.l.b16 %v448
        %v506 = vunpack.c.l.b16 %v449
        %v507 = vunpack.c.l.b16 %v450
        %v508 = vunpack.c.l.b16 %v451
        %v509 = vunpack.c.l.b16 %v452
        %v510 = vunpack.c.l.b16 %v453
        %v511 = vunpack.c.l.b16 %v454
        %v512 = vunpack.c.l.b16 %v455
        %v513 = vunpack.c.l.b16 %v456
        %v514 = vunpack.c.l.b16 %v457
        %v515 = vunpack.c.l.b16 %v458
        %v516 = vunpack.c.l.b16 %v459
        %v517 = vunpack.c.l.b16 %v460
        %v518 = vunpack.c.l.b16 %v461
        %v519 = vunpack.c.l.b16 %v462
        %v520 = vunpack.c.l.b16 %v463
        %v521 = vunpack.c.l.b16 %v464
        %v522 = vunpack.c.l.b16 %v465
        %v523 = vunpack.c.l.b16 %v466
        %v524 = vunpack.c.l.b16 %v467
        %v525 = vunpack.c.l.b16 %v468
        %v526 = vunpack.c.l.b16 %v469
        %v527 = vunpack.c.l.b16 %v470
        %v528 = vunpack.c.l.b16 %v471
        %v529 = vpack.c.b16 %v505, %v504
        %v530 = vpack.c.b16 %v507, %v506
        %v531 = vpack.c.b16 %v509, %v508
        %v532 = vpack.c.b16 %v511, %v510
        %v533 = vpack.c.b16 %v513, %v512
        %v534 = vpack.c.b16 %v515, %v514
        %v535 = vpack.c.b16 %v517, %v516
        %v536 = vpack.c.b16 %v519, %v518
        %v537 = vpack.c.b16 %v521, %v520
        %v538 = vpack.c.b16 %v523, %v522
        %v539 = vpack.c.b16 %v525, %v524
        %v540 = vpack.c.b16 %v527, %v526
        %v541 = vpack.c.b16 %v528, %v528
        %vm554 = vcmask 556032
        %v556 = vsel %vm554, %v384, 0
        %v559 = vsel %vm554, %v386, 0
        %v562 = vsel %vm554, %v388, 0
        %v565 = vsel %vm554, %v390, 0
        %v568 = vsel %vm554, %v392, 0
        %v571 = vsel %vm554, %v394, 0
        %v574 = vsel %vm554, %v396, 0
        %v577 = vsel %vm554, %v398, 0
        %v580 = vsel %vm554, %v400, 0
        %v583 = vsel %vm554, %v402, 0
        %v586 = vsel %vm554, %v404, 0
        %v589 = vsel %vm554, %v406, 0
        %v592 = vsel %vm554, %v408, 0
        %v595 = vsel %vm554, %v410, 0
        %v598 = vsel %vm554, %v412, 0
        %v601 = vsel %vm554, %v414, 0
        %v604 = vsel %vm554, %v416, 0
        %v607 = vsel %vm554, %v418, 0
        %v610 = vsel %vm554, %v420, 0
        %v613 = vsel %vm554, %v422, 0
        %v616 = vsel %vm554, %v424, 0
        %v619 = vsel %vm554, %v426, 0
        %v622 = vsel %vm554, %v428, 0
        %v625 = vsel %vm554, %v430, 0
        %v628 = vsel %vm554, %v432, 0
        %v631 = vsel %vm554, %v434, 0
        %v634 = vsel %vm554, %v436, 0
        %v637 = vsel %vm554, %v438, 0
        %v640 = vsel %vm554, %v440, 0
        %v643 = vsel %vm554, %v442, 0
        %v646 = vsel %vm554, %v444, 0
        %v649 = vsel %vm554, %v446, 0
        %vm651 = vcmask 1041408
        %v653 = vsel %vm651, %v541, 0
        %655 = vmatprep.subr.bf16.mxu0 0
        %656 = vmatpush1.bf16.msra.mxu0 %v536
        %657 = vmatprep.subr.bf16.mxu0 0
        %658 = vmatpush1.bf16.msra.mxu0 %v535
        %659 = vmatprep.subr.bf16.mxu0 0
        %660 = vmatpush1.bf16.msra.mxu0 %v534
        %661 = vmatprep.subr.bf16.mxu0 0
        %662 = vmatpush1.bf16.msra.mxu0 %v533
        %663 = vmatprep.subr.bf16.mxu0 0
        %664 = vmatpush1.bf16.msra.mxu0 %v532
        %665 = vmatprep.subr.bf16.mxu0 0
        %666 = vmatpush1.bf16.msra.mxu0 %v531
        %667 = vmatprep.subr.bf16.mxu0 0
        %668 = vmatpush1.bf16.msra.mxu0 %v530
        %669 = vmatprep.subr.bf16.mxu0 0
        %670 = vmatpush1.bf16.msra.mxu0 %v529
        %671 = vmatprep.subr.bf16.mxu0 0
        %672 = vmatpush2.bf16.msra.mxu0 0
        %673 = vmatprep.subr.bf16.mxu0 0
        %674 = vmatpush2.bf16.msra.mxu0 0
        %675 = vmatprep.subr.bf16.mxu0 0
        %676 = vmatpush2.bf16.msra.mxu0 0
        %677 = vmatprep.subr.bf16.mxu0 0
        %678 = vmatpush2.bf16.msra.mxu0 %v653
        %679 = vmatprep.subr.bf16.mxu0 0
        %680 = vmatpush2.bf16.msra.mxu0 %v540
        %681 = vmatprep.subr.bf16.mxu0 0
        %682 = vmatpush2.bf16.msra.mxu0 %v539
        %683 = vmatprep.subr.bf16.mxu0 0
        %684 = vmatpush2.bf16.msra.mxu0 %v538
        %685 = vmatprep.subr.bf16.mxu0 0
        %686 = vmatpush2.bf16.msra.mxu0 %v537
        %687 = vmatprep.mubr.bf16.mxu0 %v556
        %688 = vmatmul.mubr.bf16.gmra.mxu0 %v383
        %v689 = vpop.f32.mrf.mxu0
        %v690 = vadd.f32 %v477, %v689
        %v691 = vpop.f32.mrf.mxu0
        %v692 = vpop.f32.mrf.mxu0
        %v693 = vadd.f32 %v477, %v692
        %v694 = vpop.f32.mrf.mxu0
        %695 = vmatprep.mubr.bf16.mxu0 %v559
        %696 = vmatmul.mubr.bf16.gmra.mxu0 %v385
        %v697 = vpop.f32.mrf.mxu0
        %v698 = vadd.f32 %v477, %v697
        %v699 = vpop.f32.mrf.mxu0
        %v700 = vpop.f32.mrf.mxu0
        %v701 = vadd.f32 %v477, %v700
        %v702 = vpop.f32.mrf.mxu0
        %703 = vmatprep.mubr.bf16.mxu0 %v562
        %704 = vmatmul.mubr.bf16.gmra.mxu0 %v387
        %v705 = vpop.f32.mrf.mxu0
        %v706 = vadd.f32 %v477, %v705
        %v707 = vpop.f32.mrf.mxu0
        %v708 = vpop.f32.mrf.mxu0
        %v709 = vadd.f32 %v477, %v708
        %v710 = vpop.f32.mrf.mxu0
        %711 = vmatprep.mubr.bf16.mxu0 %v565
        %712 = vmatmul.mubr.bf16.gmra.mxu0 %v389
        %v713 = vpop.f32.mrf.mxu0
        %v714 = vadd.f32 %v477, %v713
        %v715 = vpop.f32.mrf.mxu0
        %v716 = vpop.f32.mrf.mxu0
        %v717 = vadd.f32 %v477, %v716
        %v718 = vpop.f32.mrf.mxu0
        %719 = vmatprep.mubr.bf16.mxu0 %v568
        %720 = vmatmul.mubr.bf16.gmra.mxu0 %v391
        %v721 = vpop.f32.mrf.mxu0
        %v722 = vadd.f32 %v477, %v721
        %v723 = vpop.f32.mrf.mxu0
        %v724 = vpop.f32.mrf.mxu0
        %v725 = vadd.f32 %v477, %v724
        %v726 = vpop.f32.mrf.mxu0
        %727 = vmatprep.mubr.bf16.mxu0 %v571
        %728 = vmatmul.mubr.bf16.gmra.mxu0 %v393
        %v729 = vpop.f32.mrf.mxu0
        %v730 = vadd.f32 %v477, %v729
        %v731 = vpop.f32.mrf.mxu0
        %v732 = vpop.f32.mrf.mxu0
        %v733 = vadd.f32 %v477, %v732
        %v734 = vpop.f32.mrf.mxu0
        %735 = vmatprep.mubr.bf16.mxu0 %v574
        %736 = vmatmul.mubr.bf16.gmra.mxu0 %v395
        %v737 = vpop.f32.mrf.mxu0
        %v738 = vadd.f32 %v477, %v737
        %v739 = vpop.f32.mrf.mxu0
        %v740 = vpop.f32.mrf.mxu0
        %v741 = vadd.f32 %v477, %v740
        %v742 = vpop.f32.mrf.mxu0
        %743 = vmatprep.mubr.bf16.mxu0 %v577
        %744 = vmatmul.mubr.bf16.gmra.mxu0 %v397
        %v745 = vpop.f32.mrf.mxu0
        %v746 = vadd.f32 %v477, %v745
        %v747 = vpop.f32.mrf.mxu0
        %v748 = vpop.f32.mrf.mxu0
        %v749 = vadd.f32 %v477, %v748
        %v750 = vpop.f32.mrf.mxu0
        %751 = vmatprep.mubr.bf16.mxu0 %v580
        %752 = vmatmul.mubr.bf16.gmra.mxu0 %v399
        %v753 = vpop.f32.mrf.mxu0
        %v754 = vadd.f32 %v477, %v753
        %v755 = vpop.f32.mrf.mxu0
        %v756 = vpop.f32.mrf.mxu0
        %v757 = vadd.f32 %v477, %v756
        %v758 = vpop.f32.mrf.mxu0
        %759 = vmatprep.mubr.bf16.mxu0 %v583
        %760 = vmatmul.mubr.bf16.gmra.mxu0 %v401
        %v761 = vpop.f32.mrf.mxu0
        %v762 = vadd.f32 %v477, %v761
        %v763 = vpop.f32.mrf.mxu0
        %v764 = vpop.f32.mrf.mxu0
        %v765 = vadd.f32 %v477, %v764
        %v766 = vpop.f32.mrf.mxu0
        %767 = vmatprep.mubr.bf16.mxu0 %v586
        %768 = vmatmul.mubr.bf16.gmra.mxu0 %v403
        %v769 = vpop.f32.mrf.mxu0
        %v770 = vadd.f32 %v477, %v769
        %v771 = vpop.f32.mrf.mxu0
        %v772 = vpop.f32.mrf.mxu0
        %v773 = vadd.f32 %v477, %v772
        %v774 = vpop.f32.mrf.mxu0
        %775 = vmatprep.mubr.bf16.mxu0 %v589
        %776 = vmatmul.mubr.bf16.gmra.mxu0 %v405
        %v777 = vpop.f32.mrf.mxu0
        %v778 = vadd.f32 %v477, %v777
        %v779 = vpop.f32.mrf.mxu0
        %v780 = vpop.f32.mrf.mxu0
        %v781 = vadd.f32 %v477, %v780
        %v782 = vpop.f32.mrf.mxu0
        %783 = vmatprep.mubr.bf16.mxu0 %v592
        %784 = vmatmul.mubr.bf16.gmra.mxu0 %v407
        %v785 = vpop.f32.mrf.mxu0
        %v786 = vadd.f32 %v477, %v785
        %v787 = vpop.f32.mrf.mxu0
        %v788 = vpop.f32.mrf.mxu0
        %v789 = vadd.f32 %v477, %v788
        %v790 = vpop.f32.mrf.mxu0
        %791 = vmatprep.mubr.bf16.mxu0 %v595
        %792 = vmatmul.mubr.bf16.gmra.mxu0 %v409
        %v793 = vpop.f32.mrf.mxu0
        %v794 = vadd.f32 %v477, %v793
        %v795 = vpop.f32.mrf.mxu0
        %v796 = vpop.f32.mrf.mxu0
        %v797 = vadd.f32 %v477, %v796
        %v798 = vpop.f32.mrf.mxu0
        %799 = vmatprep.mubr.bf16.mxu0 %v598
        %800 = vmatmul.mubr.bf16.gmra.mxu0 %v411
        %v801 = vpop.f32.mrf.mxu0
        %v802 = vadd.f32 %v477, %v801
        %v803 = vpop.f32.mrf.mxu0
        %v804 = vpop.f32.mrf.mxu0
        %v805 = vadd.f32 %v477, %v804
        %v806 = vpop.f32.mrf.mxu0
        %807 = vmatprep.mubr.bf16.mxu0 %v601
        %808 = vmatmul.mubr.bf16.gmra.mxu0 %v413
        %v809 = vpop.f32.mrf.mxu0
        %v810 = vadd.f32 %v477, %v809
        %v811 = vpop.f32.mrf.mxu0
        %v812 = vpop.f32.mrf.mxu0
        %v813 = vadd.f32 %v477, %v812
        %v814 = vpop.f32.mrf.mxu0
        %815 = vmatprep.mubr.bf16.mxu0 %v604
        %816 = vmatmul.mubr.bf16.gmra.mxu0 %v415
        %v817 = vpop.f32.mrf.mxu0
        %v818 = vadd.f32 %v477, %v817
        %v819 = vpop.f32.mrf.mxu0
        %v820 = vpop.f32.mrf.mxu0
        %v821 = vadd.f32 %v477, %v820
        %v822 = vpop.f32.mrf.mxu0
        %823 = vmatprep.mubr.bf16.mxu0 %v607
        %824 = vmatmul.mubr.bf16.gmra.mxu0 %v417
        %v825 = vpop.f32.mrf.mxu0
        %v826 = vadd.f32 %v477, %v825
        %v827 = vpop.f32.mrf.mxu0
        %v828 = vpop.f32.mrf.mxu0
        %v829 = vadd.f32 %v477, %v828
        %v830 = vpop.f32.mrf.mxu0
        %831 = vmatprep.mubr.bf16.mxu0 %v610
        %832 = vmatmul.mubr.bf16.gmra.mxu0 %v419
        %v833 = vpop.f32.mrf.mxu0
        %v834 = vadd.f32 %v477, %v833
        %v835 = vpop.f32.mrf.mxu0
        %v836 = vpop.f32.mrf.mxu0
        %v837 = vadd.f32 %v477, %v836
        %v838 = vpop.f32.mrf.mxu0
        %839 = vmatprep.mubr.bf16.mxu0 %v613
        %840 = vmatmul.mubr.bf16.gmra.mxu0 %v421
        %v841 = vpop.f32.mrf.mxu0
        %v842 = vadd.f32 %v477, %v841
        %v843 = vpop.f32.mrf.mxu0
        %v844 = vpop.f32.mrf.mxu0
        %v845 = vadd.f32 %v477, %v844
        %v846 = vpop.f32.mrf.mxu0
        %847 = vmatprep.mubr.bf16.mxu0 %v616
        %848 = vmatmul.mubr.bf16.gmra.mxu0 %v423
        %v849 = vpop.f32.mrf.mxu0
        %v850 = vadd.f32 %v477, %v849
        %v851 = vpop.f32.mrf.mxu0
        %v852 = vpop.f32.mrf.mxu0
        %v853 = vadd.f32 %v477, %v852
        %v854 = vpop.f32.mrf.mxu0
        %855 = vmatprep.mubr.bf16.mxu0 %v619
        %856 = vmatmul.mubr.bf16.gmra.mxu0 %v425
        %v857 = vpop.f32.mrf.mxu0
        %v858 = vadd.f32 %v477, %v857
        %v859 = vpop.f32.mrf.mxu0
        %v860 = vpop.f32.mrf.mxu0
        %v861 = vadd.f32 %v477, %v860
        %v862 = vpop.f32.mrf.mxu0
        %863 = vmatprep.mubr.bf16.mxu0 %v622
        %864 = vmatmul.mubr.bf16.gmra.mxu0 %v427
        %v865 = vpop.f32.mrf.mxu0
        %v866 = vadd.f32 %v477, %v865
        %v867 = vpop.f32.mrf.mxu0
        %v868 = vpop.f32.mrf.mxu0
        %v869 = vadd.f32 %v477, %v868
        %v870 = vpop.f32.mrf.mxu0
        %871 = vmatprep.mubr.bf16.mxu0 %v625
        %872 = vmatmul.mubr.bf16.gmra.mxu0 %v429
        %v873 = vpop.f32.mrf.mxu0
        %v874 = vadd.f32 %v477, %v873
        %v875 = vpop.f32.mrf.mxu0
        %v876 = vpop.f32.mrf.mxu0
        %v877 = vadd.f32 %v477, %v876
        %v878 = vpop.f32.mrf.mxu0
        %879 = vmatprep.mubr.bf16.mxu0 %v628
        %880 = vmatmul.mubr.bf16.gmra.mxu0 %v431
        %v881 = vpop.f32.mrf.mxu0
        %v882 = vadd.f32 %v477, %v881
        %v883 = vpop.f32.mrf.mxu0
        %v884 = vpop.f32.mrf.mxu0
        %v885 = vadd.f32 %v477, %v884
        %v886 = vpop.f32.mrf.mxu0
        %887 = vmatprep.mubr.bf16.mxu0 %v631
        %888 = vmatmul.mubr.bf16.gmra.mxu0 %v433
        %v889 = vpop.f32.mrf.mxu0
        %v890 = vadd.f32 %v477, %v889
        %v891 = vpop.f32.mrf.mxu0
        %v892 = vpop.f32.mrf.mxu0
        %v893 = vadd.f32 %v477, %v892
        %v894 = vpop.f32.mrf.mxu0
        %895 = vmatprep.mubr.bf16.mxu0 %v634
        %896 = vmatmul.mubr.bf16.gmra.mxu0 %v435
        %v897 = vpop.f32.mrf.mxu0
        %v898 = vadd.f32 %v477, %v897
        %v899 = vpop.f32.mrf.mxu0
        %v900 = vpop.f32.mrf.mxu0
        %v901 = vadd.f32 %v477, %v900
        %v902 = vpop.f32.mrf.mxu0
        %903 = vmatprep.mubr.bf16.mxu0 %v637
        %904 = vmatmul.mubr.bf16.gmra.mxu0 %v437
        %v905 = vpop.f32.mrf.mxu0
        %v906 = vadd.f32 %v477, %v905
        %v907 = vpop.f32.mrf.mxu0
        %v908 = vpop.f32.mrf.mxu0
        %v909 = vadd.f32 %v477, %v908
        %v910 = vpop.f32.mrf.mxu0
        %911 = vmatprep.mubr.bf16.mxu0 %v640
        %912 = vmatmul.mubr.bf16.gmra.mxu0 %v439
        %v913 = vpop.f32.mrf.mxu0
        %v914 = vadd.f32 %v477, %v913
        %v915 = vpop.f32.mrf.mxu0
        %v916 = vpop.f32.mrf.mxu0
        %v917 = vadd.f32 %v477, %v916
        %v918 = vpop.f32.mrf.mxu0
        %919 = vmatprep.mubr.bf16.mxu0 %v643
        %920 = vmatmul.mubr.bf16.gmra.mxu0 %v441
        %v921 = vpop.f32.mrf.mxu0
        %v922 = vadd.f32 %v477, %v921
        %v923 = vpop.f32.mrf.mxu0
        %v924 = vpop.f32.mrf.mxu0
        %v925 = vadd.f32 %v477, %v924
        %v926 = vpop.f32.mrf.mxu0
        %927 = vmatprep.mubr.bf16.mxu0 %v646
        %928 = vmatmul.mubr.bf16.gmra.mxu0 %v443
        %v929 = vpop.f32.mrf.mxu0
        %v930 = vadd.f32 %v477, %v929
        %v931 = vpop.f32.mrf.mxu0
        %v932 = vpop.f32.mrf.mxu0
        %v933 = vadd.f32 %v477, %v932
        %v934 = vpop.f32.mrf.mxu0
        %935 = vmatprep.mubr.bf16.mxu0 %v649
        %936 = vmatmul.mubr.bf16.gmra.mxu0 %v445
        %v937 = vpop.f32.mrf.mxu0
        %v938 = vadd.f32 %v477, %v937
        %v939 = vpop.f32.mrf.mxu0
        %v940 = vpop.f32.mrf.mxu0
        %v941 = vadd.f32 %v477, %v940
        %v942 = vpop.f32.mrf.mxu0
        %943 = vdwg.mxu0
        %v944 = vmul.f32 %v690, 0.5
        %v945 = vmul.f32 %v693, 0.5
        %v946 = vmul.f32 %v698, 0.5
        %v947 = vmul.f32 %v701, 0.5
        %v948 = vmul.f32 %v706, 0.5
        %v949 = vmul.f32 %v709, 0.5
        %v950 = vmul.f32 %v714, 0.5
        %v951 = vmul.f32 %v717, 0.5
        %v952 = vmul.f32 %v722, 0.5
        %v953 = vmul.f32 %v725, 0.5
        %v954 = vmul.f32 %v730, 0.5
        %v955 = vmul.f32 %v733, 0.5
        %v956 = vmul.f32 %v738, 0.5
        %v957 = vmul.f32 %v741, 0.5
        %v958 = vmul.f32 %v746, 0.5
        %v959 = vmul.f32 %v749, 0.5
        %v960 = vmul.f32 %v754, 0.5
        %v961 = vmul.f32 %v757, 0.5
        %v962 = vmul.f32 %v762, 0.5
        %v963 = vmul.f32 %v765, 0.5
        %v964 = vmul.f32 %v770, 0.5
        %v965 = vmul.f32 %v773, 0.5
        %v966 = vmul.f32 %v778, 0.5
        %v967 = vmul.f32 %v781, 0.5
        %v968 = vmul.f32 %v786, 0.5
        %v969 = vmul.f32 %v789, 0.5
        %v970 = vmul.f32 %v794, 0.5
        %v971 = vmul.f32 %v797, 0.5
        %v972 = vmul.f32 %v802, 0.5
        %v973 = vmul.f32 %v805, 0.5
        %v974 = vmul.f32 %v810, 0.5
        %v975 = vmul.f32 %v813, 0.5
        %v976 = vmul.f32 %v818, 0.5
        %v977 = vmul.f32 %v821, 0.5
        %v978 = vmul.f32 %v826, 0.5
        %v979 = vmul.f32 %v829, 0.5
        %v980 = vmul.f32 %v834, 0.5
        %v981 = vmul.f32 %v837, 0.5
        %v982 = vmul.f32 %v842, 0.5
        %v983 = vmul.f32 %v845, 0.5
        %v984 = vmul.f32 %v850, 0.5
        %v985 = vmul.f32 %v853, 0.5
        %v986 = vmul.f32 %v858, 0.5
        %v987 = vmul.f32 %v861, 0.5
        %v988 = vmul.f32 %v866, 0.5
        %v989 = vmul.f32 %v869, 0.5
        %v990 = vmul.f32 %v874, 0.5
        %v991 = vmul.f32 %v877, 0.5
        %v992 = vmul.f32 %v882, 0.5
        %v993 = vmul.f32 %v885, 0.5
        %v994 = vmul.f32 %v890, 0.5
        %v995 = vmul.f32 %v893, 0.5
        %v996 = vmul.f32 %v898, 0.5
        %v997 = vmul.f32 %v901, 0.5
        %v998 = vmul.f32 %v906, 0.5
        %v999 = vmul.f32 %v909, 0.5
        %v1000 = vmul.f32 %v914, 0.5
        %v1001 = vmul.f32 %v917, 0.5
        %v1002 = vmul.f32 %v922, 0.5
        %v1003 = vmul.f32 %v925, 0.5
        %v1004 = vmul.f32 %v930, 0.5
        %v1005 = vmul.f32 %v933, 0.5
        %v1006 = vmul.f32 %v938, 0.5
        %v1007 = vmul.f32 %v941, 0.5
        %v1008 = vpack.c.bf16 %v945, %v944
        %v1009 = vpack.c.bf16 %v947, %v946
        %v1010 = vpack.c.bf16 %v949, %v948
        %v1011 = vpack.c.bf16 %v951, %v950
        %v1012 = vpack.c.bf16 %v953, %v952
        %v1013 = vpack.c.bf16 %v955, %v954
        %v1014 = vpack.c.bf16 %v957, %v956
        %v1015 = vpack.c.bf16 %v959, %v958
        %v1016 = vpack.c.bf16 %v961, %v960
        %v1017 = vpack.c.bf16 %v963, %v962
        %v1018 = vpack.c.bf16 %v965, %v964
        %v1019 = vpack.c.bf16 %v967, %v966
        %v1020 = vpack.c.bf16 %v969, %v968
        %v1021 = vpack.c.bf16 %v971, %v970
        %v1022 = vpack.c.bf16 %v973, %v972
        %v1023 = vpack.c.bf16 %v975, %v974
        %v1024 = vpack.c.bf16 %v977, %v976
        %v1025 = vpack.c.bf16 %v979, %v978
        %v1026 = vpack.c.bf16 %v981, %v980
        %v1027 = vpack.c.bf16 %v983, %v982
        %v1028 = vpack.c.bf16 %v985, %v984
        %v1029 = vpack.c.bf16 %v987, %v986
        %v1030 = vpack.c.bf16 %v989, %v988
        %v1031 = vpack.c.bf16 %v991, %v990
        %v1032 = vpack.c.bf16 %v993, %v992
        %v1033 = vpack.c.bf16 %v995, %v994
        %v1034 = vpack.c.bf16 %v997, %v996
        %v1035 = vpack.c.bf16 %v999, %v998
        %v1036 = vpack.c.bf16 %v1001, %v1000
        %v1037 = vpack.c.bf16 %v1003, %v1002
        %v1038 = vpack.c.bf16 %v1005, %v1004
        %v1039 = vpack.c.bf16 %v1007, %v1006
        %v1040 = vtanh.bf16.pop %v1008
        %v1041 = vtanh.bf16.pop %v1009
        %v1042 = vtanh.bf16.pop %v1010
        %v1043 = vtanh.bf16.pop %v1011
        %v1044 = vtanh.bf16.pop %v1012
        %v1045 = vtanh.bf16.pop %v1013
        %v1046 = vtanh.bf16.pop %v1014
        %v1047 = vtanh.bf16.pop %v1015
        %v1048 = vtanh.bf16.pop %v1016
        %v1049 = vtanh.bf16.pop %v1017
        %v1050 = vtanh.bf16.pop %v1018
        %v1051 = vtanh.bf16.pop %v1019
        %v1052 = vtanh.bf16.pop %v1020
        %v1053 = vtanh.bf16.pop %v1021
        %v1054 = vtanh.bf16.pop %v1022
        %v1055 = vtanh.bf16.pop %v1023
        %v1056 = vtanh.bf16.pop %v1024
        %v1057 = vtanh.bf16.pop %v1025
        %v1058 = vtanh.bf16.pop %v1026
        %v1059 = vtanh.bf16.pop %v1027
        %v1060 = vtanh.bf16.pop %v1028
        %v1061 = vtanh.bf16.pop %v1029
        %v1062 = vtanh.bf16.pop %v1030
        %v1063 = vtanh.bf16.pop %v1031
        %v1064 = vtanh.bf16.pop %v1032
        %v1065 = vtanh.bf16.pop %v1033
        %v1066 = vtanh.bf16.pop %v1034
        %v1067 = vtanh.bf16.pop %v1035
        %v1068 = vtanh.bf16.pop %v1036
        %v1069 = vtanh.bf16.pop %v1037
        %v1070 = vtanh.bf16.pop %v1038
        %v1071 = vtanh.bf16.pop %v1039
        %v1072 = vunpack.c.l.bf16 %v1040
        %v1073 = vunpack.c.h.bf16 %v1040
        %v1074 = vunpack.c.l.bf16 %v1041
        %v1075 = vunpack.c.h.bf16 %v1041
        %v1076 = vunpack.c.l.bf16 %v1042
        %v1077 = vunpack.c.h.bf16 %v1042
        %v1078 = vunpack.c.l.bf16 %v1043
        %v1079 = vunpack.c.h.bf16 %v1043
        %v1080 = vunpack.c.l.bf16 %v1044
        %v1081 = vunpack.c.h.bf16 %v1044
        %v1082 = vunpack.c.l.bf16 %v1045
        %v1083 = vunpack.c.h.bf16 %v1045
        %v1084 = vunpack.c.l.bf16 %v1046
        %v1085 = vunpack.c.h.bf16 %v1046
        %v1086 = vunpack.c.l.bf16 %v1047
        %v1087 = vunpack.c.h.bf16 %v1047
        %v1088 = vunpack.c.l.bf16 %v1048
        %v1089 = vunpack.c.h.bf16 %v1048
        %v1090 = vunpack.c.l.bf16 %v1049
        %v1091 = vunpack.c.h.bf16 %v1049
        %v1092 = vunpack.c.l.bf16 %v1050
        %v1093 = vunpack.c.h.bf16 %v1050
        %v1094 = vunpack.c.l.bf16 %v1051
        %v1095 = vunpack.c.h.bf16 %v1051
        %v1096 = vunpack.c.l.bf16 %v1052
        %v1097 = vunpack.c.h.bf16 %v1052
        %v1098 = vunpack.c.l.bf16 %v1053
        %v1099 = vunpack.c.h.bf16 %v1053
        %v1100 = vunpack.c.l.bf16 %v1054
        %v1101 = vunpack.c.h.bf16 %v1054
        %v1102 = vunpack.c.l.bf16 %v1055
        %v1103 = vunpack.c.h.bf16 %v1055
        %v1104 = vunpack.c.l.bf16 %v1056
        %v1105 = vunpack.c.h.bf16 %v1056
        %v1106 = vunpack.c.l.bf16 %v1057
        %v1107 = vunpack.c.h.bf16 %v1057
        %v1108 = vunpack.c.l.bf16 %v1058
        %v1109 = vunpack.c.h.bf16 %v1058
        %v1110 = vunpack.c.l.bf16 %v1059
        %v1111 = vunpack.c.h.bf16 %v1059
        %v1112 = vunpack.c.l.bf16 %v1060
        %v1113 = vunpack.c.h.bf16 %v1060
        %v1114 = vunpack.c.l.bf16 %v1061
        %v1115 = vunpack.c.h.bf16 %v1061
        %v1116 = vunpack.c.l.bf16 %v1062
        %v1117 = vunpack.c.h.bf16 %v1062
        %v1118 = vunpack.c.l.bf16 %v1063
        %v1119 = vunpack.c.h.bf16 %v1063
        %v1120 = vunpack.c.l.bf16 %v1064
        %v1121 = vunpack.c.h.bf16 %v1064
        %v1122 = vunpack.c.l.bf16 %v1065
        %v1123 = vunpack.c.h.bf16 %v1065
        %v1124 = vunpack.c.l.bf16 %v1066
        %v1125 = vunpack.c.h.bf16 %v1066
        %v1126 = vunpack.c.l.bf16 %v1067
        %v1127 = vunpack.c.h.bf16 %v1067
        %v1128 = vunpack.c.l.bf16 %v1068
        %v1129 = vunpack.c.h.bf16 %v1068
        %v1130 = vunpack.c.l.bf16 %v1069
        %v1131 = vunpack.c.h.bf16 %v1069
        %v1132 = vunpack.c.l.bf16 %v1070
        %v1133 = vunpack.c.h.bf16 %v1070
        %v1134 = vunpack.c.l.bf16 %v1071
        %v1135 = vunpack.c.h.bf16 %v1071
        %v1136 = vmul.f32 %v1072, 0.5
        %v1137 = vmul.f32 %v1073, 0.5
        %v1138 = vmul.f32 %v1074, 0.5
        %v1139 = vmul.f32 %v1075, 0.5
        %v1140 = vmul.f32 %v1076, 0.5
        %v1141 = vmul.f32 %v1077, 0.5
        %v1142 = vmul.f32 %v1078, 0.5
        %v1143 = vmul.f32 %v1079, 0.5
        %v1144 = vmul.f32 %v1080, 0.5
        %v1145 = vmul.f32 %v1081, 0.5
        %v1146 = vmul.f32 %v1082, 0.5
        %v1147 = vmul.f32 %v1083, 0.5
        %v1148 = vmul.f32 %v1084, 0.5
        %v1149 = vmul.f32 %v1085, 0.5
        %v1150 = vmul.f32 %v1086, 0.5
        %v1151 = vmul.f32 %v1087, 0.5
        %v1152 = vmul.f32 %v1088, 0.5
        %v1153 = vmul.f32 %v1089, 0.5
        %v1154 = vmul.f32 %v1090, 0.5
        %v1155 = vmul.f32 %v1091, 0.5
        %v1156 = vmul.f32 %v1092, 0.5
        %v1157 = vmul.f32 %v1093, 0.5
        %v1158 = vmul.f32 %v1094, 0.5
        %v1159 = vmul.f32 %v1095, 0.5
        %v1160 = vmul.f32 %v1096, 0.5
        %v1161 = vmul.f32 %v1097, 0.5
        %v1162 = vmul.f32 %v1098, 0.5
        %v1163 = vmul.f32 %v1099, 0.5
        %v1164 = vmul.f32 %v1100, 0.5
        %v1165 = vmul.f32 %v1101, 0.5
        %v1166 = vmul.f32 %v1102, 0.5
        %v1167 = vmul.f32 %v1103, 0.5
        %v1168 = vmul.f32 %v1104, 0.5
        %v1169 = vmul.f32 %v1105, 0.5
        %v1170 = vmul.f32 %v1106, 0.5
        %v1171 = vmul.f32 %v1107, 0.5
        %v1172 = vmul.f32 %v1108, 0.5
        %v1173 = vmul.f32 %v1109, 0.5
        %v1174 = vmul.f32 %v1110, 0.5
        %v1175 = vmul.f32 %v1111, 0.5
        %v1176 = vmul.f32 %v1112, 0.5
        %v1177 = vmul.f32 %v1113, 0.5
        %v1178 = vmul.f32 %v1114, 0.5
        %v1179 = vmul.f32 %v1115, 0.5
        %v1180 = vmul.f32 %v1116, 0.5
        %v1181 = vmul.f32 %v1117, 0.5
        %v1182 = vmul.f32 %v1118, 0.5
        %v1183 = vmul.f32 %v1119, 0.5
        %v1184 = vmul.f32 %v1120, 0.5
        %v1185 = vmul.f32 %v1121, 0.5
        %v1186 = vmul.f32 %v1122, 0.5
        %v1187 = vmul.f32 %v1123, 0.5
        %v1188 = vmul.f32 %v1124, 0.5
        %v1189 = vmul.f32 %v1125, 0.5
        %v1190 = vmul.f32 %v1126, 0.5
        %v1191 = vmul.f32 %v1127, 0.5
        %v1192 = vmul.f32 %v1128, 0.5
        %v1193 = vmul.f32 %v1129, 0.5
        %v1194 = vmul.f32 %v1130, 0.5
        %v1195 = vmul.f32 %v1131, 0.5
        %v1196 = vmul.f32 %v1132, 0.5
        %v1197 = vmul.f32 %v1133, 0.5
        %v1198 = vmul.f32 %v1134, 0.5
        %v1199 = vmul.f32 %v1135, 0.5
        %v1200 = vadd.f32 %v1136, 0.5
        %v1201 = vadd.f32 %v1137, 0.5
        %v1202 = vadd.f32 %v1138, 0.5
        %v1203 = vadd.f32 %v1139, 0.5
        %v1204 = vadd.f32 %v1140, 0.5
        %v1205 = vadd.f32 %v1141, 0.5
        %v1206 = vadd.f32 %v1142, 0.5
        %v1207 = vadd.f32 %v1143, 0.5
        %v1208 = vadd.f32 %v1144, 0.5
        %v1209 = vadd.f32 %v1145, 0.5
        %v1210 = vadd.f32 %v1146, 0.5
        %v1211 = vadd.f32 %v1147, 0.5
        %v1212 = vadd.f32 %v1148, 0.5
        %v1213 = vadd.f32 %v1149, 0.5
        %v1214 = vadd.f32 %v1150, 0.5
        %v1215 = vadd.f32 %v1151, 0.5
        %v1216 = vadd.f32 %v1152, 0.5
        %v1217 = vadd.f32 %v1153, 0.5
        %v1218 = vadd.f32 %v1154, 0.5
        %v1219 = vadd.f32 %v1155, 0.5
        %v1220 = vadd.f32 %v1156, 0.5
        %v1221 = vadd.f32 %v1157, 0.5
        %v1222 = vadd.f32 %v1158, 0.5
        %v1223 = vadd.f32 %v1159, 0.5
        %v1224 = vadd.f32 %v1160, 0.5
        %v1225 = vadd.f32 %v1161, 0.5
        %v1226 = vadd.f32 %v1162, 0.5
        %v1227 = vadd.f32 %v1163, 0.5
        %v1228 = vadd.f32 %v1164, 0.5
        %v1229 = vadd.f32 %v1165, 0.5
        %v1230 = vadd.f32 %v1166, 0.5
        %v1231 = vadd.f32 %v1167, 0.5
        %v1232 = vadd.f32 %v1168, 0.5
        %v1233 = vadd.f32 %v1169, 0.5
        %v1234 = vadd.f32 %v1170, 0.5
        %v1235 = vadd.f32 %v1171, 0.5
        %v1236 = vadd.f32 %v1172, 0.5
        %v1237 = vadd.f32 %v1173, 0.5
        %v1238 = vadd.f32 %v1174, 0.5
        %v1239 = vadd.f32 %v1175, 0.5
        %v1240 = vadd.f32 %v1176, 0.5
        %v1241 = vadd.f32 %v1177, 0.5
        %v1242 = vadd.f32 %v1178, 0.5
        %v1243 = vadd.f32 %v1179, 0.5
        %v1244 = vadd.f32 %v1180, 0.5
        %v1245 = vadd.f32 %v1181, 0.5
        %v1246 = vadd.f32 %v1182, 0.5
        %v1247 = vadd.f32 %v1183, 0.5
        %v1248 = vadd.f32 %v1184, 0.5
        %v1249 = vadd.f32 %v1185, 0.5
        %v1250 = vadd.f32 %v1186, 0.5
        %v1251 = vadd.f32 %v1187, 0.5
        %v1252 = vadd.f32 %v1188, 0.5
        %v1253 = vadd.f32 %v1189, 0.5
        %v1254 = vadd.f32 %v1190, 0.5
        %v1255 = vadd.f32 %v1191, 0.5
        %v1256 = vadd.f32 %v1192, 0.5
        %v1257 = vadd.f32 %v1193, 0.5
        %v1258 = vadd.f32 %v1194, 0.5
        %v1259 = vadd.f32 %v1195, 0.5
        %v1260 = vadd.f32 %v1196, 0.5
        %v1261 = vadd.f32 %v1197, 0.5
        %v1262 = vadd.f32 %v1198, 0.5
        %v1263 = vadd.f32 %v1199, 0.5
        %v1264 = vld [vmem:[%s3] sm:$0xff]
        %v1265 = vld [vmem:[%s4] sm:$0xff]
        %1267 = vset.pattern.permute.xlu0 0
        %1268 = vperm.xlu0 %1267, %v1265
        %v1269 = vpop.permute.xlu0 %1268
        %1271 = vmatprep.subr.mxu0 0.0
        %1272 = vmatpush1.xpose.msra.mxu0 %v1215
        %1273 = vmatprep.subr.mxu0 0.0
        %1274 = vmatpush1.xpose.msra.mxu0 %v1214
        %1275 = vmatprep.subr.mxu0 0.0
        %1276 = vmatpush1.xpose.msra.mxu0 %v1213
        %1277 = vmatprep.subr.mxu0 0.0
        %1278 = vmatpush1.xpose.msra.mxu0 %v1212
        %1279 = vmatprep.subr.mxu0 0.0
        %1280 = vmatpush1.xpose.msra.mxu0 %v1211
        %1281 = vmatprep.subr.mxu0 0.0
        %1282 = vmatpush1.xpose.msra.mxu0 %v1210
        %1283 = vmatprep.subr.mxu0 0.0
        %1284 = vmatpush1.xpose.msra.mxu0 %v1209
        %1285 = vmatprep.subr.mxu0 0.0
        %1286 = vmatpush1.xpose.msra.mxu0 %v1208
        %1287 = vmatprep.subr.mxu0 0.0
        %1288 = vmatpush1.xpose.msra.mxu0 %v1207
        %1289 = vmatprep.subr.mxu0 0.0
        %1290 = vmatpush1.xpose.msra.mxu0 %v1206
        %1291 = vmatprep.subr.mxu0 0.0
        %1292 = vmatpush1.xpose.msra.mxu0 %v1205
        %1293 = vmatprep.subr.mxu0 0.0
        %1294 = vmatpush1.xpose.msra.mxu0 %v1204
        %1295 = vmatprep.subr.mxu0 0.0
        %1296 = vmatpush1.xpose.msra.mxu0 %v1203
        %1297 = vmatprep.subr.mxu0 0.0
        %1298 = vmatpush1.xpose.msra.mxu0 %v1202
        %1299 = vmatprep.subr.mxu0 0.0
        %1300 = vmatpush1.xpose.msra.mxu0 %v1201
        %1301 = vmatprep.subr.mxu0 0.0
        %1302 = vmatpush1.xpose.msra.mxu0 %v1200
        %1303 = vmatprep.subr.mxu0 0.0
        %1304 = vmatpush2.xpose.msra.mxu0 %v1231
        %1305 = vmatprep.subr.mxu0 0.0
        %1306 = vmatpush2.xpose.msra.mxu0 %v1230
        %1307 = vmatprep.subr.mxu0 0.0
        %1308 = vmatpush2.xpose.msra.mxu0 %v1229
        %1309 = vmatprep.subr.mxu0 0.0
        %1310 = vmatpush2.xpose.msra.mxu0 %v1228
        %1311 = vmatprep.subr.mxu0 0.0
        %1312 = vmatpush2.xpose.msra.mxu0 %v1227
        %1313 = vmatprep.subr.mxu0 0.0
        %1314 = vmatpush2.xpose.msra.mxu0 %v1226
        %1315 = vmatprep.subr.mxu0 0.0
        %1316 = vmatpush2.xpose.msra.mxu0 %v1225
        %1317 = vmatprep.subr.mxu0 0.0
        %1318 = vmatpush2.xpose.msra.mxu0 %v1224
        %1319 = vmatprep.subr.mxu0 0.0
        %1320 = vmatpush2.xpose.msra.mxu0 %v1223
        %1321 = vmatprep.subr.mxu0 0.0
        %1322 = vmatpush2.xpose.msra.mxu0 %v1222
        %1323 = vmatprep.subr.mxu0 0.0
        %1324 = vmatpush2.xpose.msra.mxu0 %v1221
        %1325 = vmatprep.subr.mxu0 0.0
        %1326 = vmatpush2.xpose.msra.mxu0 %v1220
        %1327 = vmatprep.subr.mxu0 0.0
        %1328 = vmatpush2.xpose.msra.mxu0 %v1219
        %1329 = vmatprep.subr.mxu0 0.0
        %1330 = vmatpush2.xpose.msra.mxu0 %v1218
        %1331 = vmatprep.subr.mxu0 0.0
        %1332 = vmatpush2.xpose.msra.mxu0 %v1217
        %1333 = vmatprep.subr.mxu0 0.0
        %1334 = vmatpush2.xpose.msra.mxu0 %v1216
        %1335 = vmatprep.mubr.f32.mxu0 0.0
        %1336 = vmatmul.mubr.f32.gmra.mxu0 %v1264
        %v1337 = vpop.f32.mrf.mxu0
        %v1338 = vadd.f32 %v1269, %v1337
        %v1339 = vpop.f32.mrf.mxu0
        %v1340 = vadd.f32 %v1269, %v1339
        %1341 = vdwg.mxu0
        %1342 = vmatprep.subr.mxu0 0.0
        %1343 = vmatpush1.xpose.msra.mxu0 %v1247
        %1344 = vmatprep.subr.mxu0 0.0
        %1345 = vmatpush1.xpose.msra.mxu0 %v1246
        %1346 = vmatprep.subr.mxu0 0.0
        %1347 = vmatpush1.xpose.msra.mxu0 %v1245
        %1348 = vmatprep.subr.mxu0 0.0
        %1349 = vmatpush1.xpose.msra.mxu0 %v1244
        %1350 = vmatprep.subr.mxu0 0.0
        %1351 = vmatpush1.xpose.msra.mxu0 %v1243
        %1352 = vmatprep.subr.mxu0 0.0
        %1353 = vmatpush1.xpose.msra.mxu0 %v1242
        %1354 = vmatprep.subr.mxu0 0.0
        %1355 = vmatpush1.xpose.msra.mxu0 %v1241
        %1356 = vmatprep.subr.mxu0 0.0
        %1357 = vmatpush1.xpose.msra.mxu0 %v1240
        %1358 = vmatprep.subr.mxu0 0.0
        %1359 = vmatpush1.xpose.msra.mxu0 %v1239
        %1360 = vmatprep.subr.mxu0 0.0
        %1361 = vmatpush1.xpose.msra.mxu0 %v1238
        %1362 = vmatprep.subr.mxu0 0.0
        %1363 = vmatpush1.xpose.msra.mxu0 %v1237
        %1364 = vmatprep.subr.mxu0 0.0
        %1365 = vmatpush1.xpose.msra.mxu0 %v1236
        %1366 = vmatprep.subr.mxu0 0.0
        %1367 = vmatpush1.xpose.msra.mxu0 %v1235
        %1368 = vmatprep.subr.mxu0 0.0
        %1369 = vmatpush1.xpose.msra.mxu0 %v1234
        %1370 = vmatprep.subr.mxu0 0.0
        %1371 = vmatpush1.xpose.msra.mxu0 %v1233
        %1372 = vmatprep.subr.mxu0 0.0
        %1373 = vmatpush1.xpose.msra.mxu0 %v1232
        %1374 = vmatprep.subr.mxu0 0.0
        %1375 = vmatpush2.xpose.msra.mxu0 %v1263
        %1376 = vmatprep.subr.mxu0 0.0
        %1377 = vmatpush2.xpose.msra.mxu0 %v1262
        %1378 = vmatprep.subr.mxu0 0.0
        %1379 = vmatpush2.xpose.msra.mxu0 %v1261
        %1380 = vmatprep.subr.mxu0 0.0
        %1381 = vmatpush2.xpose.msra.mxu0 %v1260
        %1382 = vmatprep.subr.mxu0 0.0
        %1383 = vmatpush2.xpose.msra.mxu0 %v1259
        %1384 = vmatprep.subr.mxu0 0.0
        %1385 = vmatpush2.xpose.msra.mxu0 %v1258
        %1386 = vmatprep.subr.mxu0 0.0
        %1387 = vmatpush2.xpose.msra.mxu0 %v1257
        %1388 = vmatprep.subr.mxu0 0.0
        %1389 = vmatpush2.xpose.msra.mxu0 %v1256
        %1390 = vmatprep.subr.mxu0 0.0
        %1391 = vmatpush2.xpose.msra.mxu0 %v1255
        %1392 = vmatprep.subr.mxu0 0.0
        %1393 = vmatpush2.xpose.msra.mxu0 %v1254
        %1394 = vmatprep.subr.mxu0 0.0
        %1395 = vmatpush2.xpose.msra.mxu0 %v1253
        %1396 = vmatprep.subr.mxu0 0.0
        %1397 = vmatpush2.xpose.msra.mxu0 %v1252
        %1398 = vmatprep.subr.mxu0 0.0
        %1399 = vmatpush2.xpose.msra.mxu0 %v1251
        %1400 = vmatprep.subr.mxu0 0.0
        %1401 = vmatpush2.xpose.msra.mxu0 %v1250
        %1402 = vmatprep.subr.mxu0 0.0
        %1403 = vmatpush2.xpose.msra.mxu0 %v1249
        %1404 = vmatprep.subr.mxu0 0.0
        %1405 = vmatpush2.xpose.msra.mxu0 %v1248
        %1406 = vmatprep.mubr.f32.mxu0 0.0
        %1407 = vmatmul.mubr.f32.gmra.mxu0 %v1264
        %v1408 = vpop.f32.mrf.mxu0
        %v1409 = vadd.f32 %v1269, %v1408
        %v1410 = vpop.f32.mrf.mxu0
        %v1411 = vadd.f32 %v1269, %v1410
        %1412 = vdwg.mxu0
        %v1413 = vmul.f32 %v1338, 0.5
        %v1414 = vmul.f32 %v1340, 0.5
        %v1415 = vmul.f32 %v1409, 0.5
        %v1416 = vmul.f32 %v1411, 0.5
        %v1417 = vtanh.pop %v1413
        %v1418 = vtanh.pop %v1414
        %v1419 = vtanh.pop %v1415
        %v1420 = vtanh.pop %v1416
        %v1421 = vmul.f32 %v1417, 0.5
        %v1422 = vmul.f32 %v1418, 0.5
        %v1423 = vmul.f32 %v1419, 0.5
        %v1424 = vmul.f32 %v1420, 0.5
        %v1425 = vadd.f32 %v1421, 0.5
        %v1426 = vadd.f32 %v1422, 0.5
        %v1427 = vadd.f32 %v1423, 0.5
        %v1428 = vadd.f32 %v1424, 0.5
        %1429 = vst [vmem:[%s235] sm:$0xff] %v1425
        %1430 = vst [vmem:[%s235 + $0x8] sm:$0xff] %v1426
        %1431 = vst [vmem:[%s235 + $0x10] sm:$0xff] %v1427
        %1432 = vst [vmem:[%s235 + $0x18] sm:$0xff] %v1428
        %s1433 = sand.u32 %s137, 1
        %s1434 = scalar_lea.sflag [#allocation3], %s1433
        %s1435 = sand.u32 %s137, 1
        %s1436 = smul.addr %s1435, 32
        %s1437 = scalar_lea.vmem [#allocation2], %s1436
        // Predicated region
        $region41: #{tpu_custom_call.1} parent=39 // pred_check
          %p1438 = pneg %p147
        $region42: #{tpu_custom_call.1} parent=39 // pred_check_branch
          %1440 = sbr.rel (%p1438) target = $region44
        $region43: #{tpu_custom_call.1} parent=39 // pred_region
          %s1441 = smul.u32 4, %s19
          %s1443 = ssub.s32 512, 512
          %1444 = vsyncadd %s1434, %s1443
          %s1445 = smul.addr %s1441, 128
          %s1446 = scalar_lea.hbm %s5, %s1445
          %s1448 = sshll.u32 %s1437, 4
          %s1449 = int_to_ptr.vmem [resolvable:$true] %s1448
          %1451 = dma.vmem_to_hbm [thread:$0]  %s1449, 512, %s1446, %s1434
        $region44: #{tpu_custom_call.1} parent=39 // pred_fallthru
          _
      $region40: #{tpu_custom_call.1} parent=5 // pred_fallthru
        _
      %p1452 = scmp.le.s32.totalorder 2, %s14
      // Predicated region
      $region45: #{tpu_custom_call.1} parent=5 // pred_check
        %p1453 = pneg %p1452
      $region46: #{tpu_custom_call.1} parent=5 // pred_check_branch
        %1455 = sbr.rel (%p1453) target = $region48
      $region47: #{tpu_custom_call.1} parent=5 // pred_region
        %s1456 = ssub.s32 %s14, 2
        // Predicated region
        $region49: #{tpu_custom_call.1} parent=47 // pred_check
          %p1457 = pneg %p153
        $region50: #{tpu_custom_call.1} parent=47 // pred_check_branch
          %1459 = sbr.rel (%p1457) target = $region52
        $region51: #{tpu_custom_call.1} parent=47 // pred_region
          %s1460 = sand.u32 %s138, 1
          %s1461 = scalar_lea.sflag [#allocation3], %s1460
          %s1462 = sand.u32 %s138, 1
          %s1463 = smul.addr %s1462, 32
          %s1464 = scalar_lea.vmem [#allocation2], %s1463
          %1465 = dma.done %s1461, 512
        $region52: #{tpu_custom_call.1} parent=47 // pred_fallthru
          _
      $region48: #{tpu_custom_call.1} parent=5 // pred_fallthru
        _
    $region6: #{tpu_custom_call.1} parent=1 // loop_footer
      %s18 = sadd.s32 1, %s14
    $region7: #{tpu_custom_call.1} parent=1 // loop_footer_branch
      %13 = sbr.rel target = $region3
    $region8: #{tpu_custom_call.1} parent=1 // loop_exit
      _
    %1466 = vsyncpa [#allocation3], 1
    %s1467 = scalar_lea.sflag [#allocation3], 1
    %1468 = vsyncpa %s1467, 1

</llo_original>
